<compile_context>
chip_gen: v7x
topology: tpu7x:2x2x1
jax: 0.10.0
libtpu: 0.0.40
codegen_flags: <defaults>
</compile_context>

<pallas_src>
import functools

import jax
import jax.numpy as jnp
from jax.experimental import pallas as pl
from jax.experimental.pallas import tpu as pltpu


def _se_kernel(x_ref, w1_ref, b1_ref, w2_ref, b2_ref, o_ref, *, inv_hw):
    # x_ref: (Bn, C, HW) slab -- channels on sublanes, spatial on lanes.
    # --- AdaptiveAvgPool2d(1): f32 accumulation over the spatial lanes ---
    # (Kept on the VPU/XLU: an MXU ones-matvec would need a (Bn*C,1)->(Bn,C)
    #  relayout whose shape-cast support is not guaranteed; the slab DMA is
    #  the bottleneck here, not the reduction.)
    pooled = jnp.sum(x_ref[...].astype(jnp.float32), axis=-1) * inv_hw  # (Bn, C)

    # --- 1x1 conv C -> C/r (weight pre-transposed, BN1 scale folded in),
    #     BN1 shift, ReLU ---
    h1 = jnp.dot(pooled, w1_ref[...], preferred_element_type=jnp.float32)
    h1 = jnp.maximum(h1 + b1_ref[...], 0.0)                             # (Bn, Cr)

    # --- 1x1 conv C/r -> C (weight pre-transposed, BN2 scale folded in),
    #     BN2 shift, hsigmoid ---
    g = jnp.dot(h1, w2_ref[...], preferred_element_type=jnp.float32) + b2_ref[...]
    g = jnp.clip(g + 3.0, 0.0, 6.0) * (1.0 / 6.0)                       # (Bn, C)

    # --- out = x * gate. Re-read the slab from VMEM (cheap: 3 vld/cycle) so
    #     it is not held live across the matmuls above. Multiply in x's dtype
    #     to keep the dominant elementwise phase narrow for bf16 activations.
    x = x_ref[...]
    o_ref[...] = (x * g.astype(x.dtype)[:, :, None]).astype(o_ref.dtype)


def _device_kind():
    try:
        return jax.devices()[0].device_kind.lower()
    except Exception:  # pragma: no cover - defensive
        return ""


def _make_x_spec(shape, index_map, buffer_count):
    """Input BlockSpec with optional deeper pipelining (v7x)."""
    if buffer_count == 2:
        return pl.BlockSpec(shape, index_map)
    try:
        return pl.BlockSpec(shape, index_map,
                            pipeline_mode=pl.Buffered(buffer_count))
    except (TypeError, AttributeError):
        # Older/newer API without pipeline_mode/Buffered: fall back to default.
        return pl.BlockSpec(shape, index_map)


def se_module(x, w1, bn1_scale, bn1_bias, w2, bn2_scale, bn2_bias,
              *, vmem_limit_bytes=None):
    """x: (N, C, H, W). Returns (N, C, H, W). BN already folded to scale/bias."""
    N, C, H, W = x.shape
    Cr = w1.shape[0]
    HW = H * W

    kind = _device_kind()
    is_v7 = ("v7" in kind) or ("tpu7" in kind)

    if vmem_limit_bytes is None:
        # v7x: 64 MiB VMEM per TC -> stay well under; v4/v5e/v6e: 128 MiB physical.
        vmem_limit_bytes = (44 if is_v7 else 96) * 1024 * 1024

    # Deeper input buffering on v7x: at ~3.2 TB/s the per-step DMA is short and
    # the serial pool->matmul->matmul->multiply chain can expose latency.
    n_bufs = 3 if is_v7 else 2

    # --- tiling policy: size Bn from the VMEM budget --------------------------
    itemsize = jnp.dtype(x.dtype).itemsize
    per_batch = C * HW * itemsize                       # one batch plane of x
    weight_bytes = (2 * C * Cr + C + Cr) * jnp.dtype(w1.dtype).itemsize
    avail = int(vmem_limit_bytes * 0.75) - weight_bytes     # ~25% headroom
    # input is n_bufs-buffered, output is double-buffered.
    slab_budget = min(avail // (n_bufs + 2), 8 * 1024 * 1024)
    slab_budget = max(slab_budget, per_batch)
    Bn = max(1, min(N, slab_budget // per_batch))
    if N > 1:
        # >= 2 grid steps: lets the pipeline overlap DMA with compute and lets
        # "parallel" shard across both v7x TensorCores.
        Bn = min(Bn, pl.cdiv(N, 2))
    num_blocks = pl.cdiv(N, Bn)   # ragged last block handled by Pallas
    # TODO(synk): if a single sample (C*HW) ever overflows the VMEM budget,
    # fall back to a two-pass spatial split (pool+gate kernel, then x*g kernel).

    x_flat = x.reshape(N, C, HW)   # free metadata reshape; no pad, no extra HBM pass

    # One-time wrapper-side prep: pre-transpose the 1x1-conv weights and fold
    # the BN scales into their columns; only the BN shifts remain as operands.
    w1f = jnp.transpose(w1) * bn1_scale.reshape(1, Cr)       # (C, Cr)
    w2f = jnp.transpose(w2) * bn2_scale.reshape(1, C)        # (Cr, C)
    b1 = bn1_bias.reshape(1, Cr)
    b2 = bn2_bias.reshape(1, C)

    kernel = functools.partial(_se_kernel, inv_hw=1.0 / HW)

    bytes_accessed = 2 * N * C * HW * itemsize + 2 * weight_bytes
    flops = 2 * N * C * HW + 4 * N * C * Cr   # pool + multiply + two tiny matmuls

    idx_x = lambda n: (n, 0, 0)
    idx_w = lambda n: (0, 0)

    out = pl.pallas_call(
        kernel,
        out_shape=jax.ShapeDtypeStruct((N, C, HW), x.dtype),
        grid_spec=pltpu.PrefetchScalarGridSpec(
            num_scalar_prefetch=0,
            grid=(num_blocks,),
            in_specs=[
                _make_x_spec((Bn, C, HW), idx_x, n_bufs),   # x slab
                pl.BlockSpec((C, Cr), idx_w),               # w1^T * bn1_scale
                pl.BlockSpec((1, Cr), idx_w),               # bn1 bias
                pl.BlockSpec((Cr, C), idx_w),               # w2^T * bn2_scale
                pl.BlockSpec((1, C), idx_w),                # bn2 bias
            ],
            out_specs=pl.BlockSpec((Bn, C, HW), idx_x),
        ),
        compiler_params=pltpu.CompilerParams(
            dimension_semantics=("parallel",),
            vmem_limit_bytes=vmem_limit_bytes),
        cost_estimate=pl.CostEstimate(
            flops=flops, transcendentals=0, bytes_accessed=bytes_accessed),
    )(x_flat, w1f, b1, w2f, b2)

    return out.reshape(N, C, H, W)


def _reference(x, w1, s1, b1, w2, s2, b2):
    pooled = jnp.mean(x, axis=(2, 3))                        # (N, C)
    h1 = jnp.maximum(pooled @ w1.T * s1 + b1, 0.0)           # (N, Cr)
    g = h1 @ w2.T * s2 + b2                                  # (N, C)
    g = jnp.clip(g + 3.0, 0.0, 6.0) / 6.0
    return x * g[:, :, None, None]


if __name__ == "__main__":
    # Small but representative: HW = 49 is NOT a multiple of 128 (exercises the
    # masked-store / no-pad path) and N = 5 does not divide evenly by the
    # chosen Bn (exercises the ragged last grid block).
    N, C, H, W = 5, 16, 7, 7
    reduction = 4
    Cr = C // reduction
    eps = 1e-5

    key = jax.random.PRNGKey(0)
    k_x, k_w1, k_w2, k_g1, k_b1, k_g2, k_b2 = jax.random.split(key, 7)

    x = jax.random.normal(k_x, (N, C, H, W), dtype=jnp.float32)

    # Conv weights (1x1, no bias) -> plain matrices.
    w1 = jax.random.normal(k_w1, (Cr, C), dtype=jnp.float32) * 0.3
    w2 = jax.random.normal(k_w2, (C, Cr), dtype=jnp.float32) * 0.3

    # BatchNorm parameters (inference mode), deterministic values.
    gamma1 = 1.0 + 0.1 * jax.random.normal(k_g1, (Cr,), dtype=jnp.float32)
    beta1 = 0.1 * jax.random.normal(k_b1, (Cr,), dtype=jnp.float32)
    mean1 = jnp.zeros((Cr,), jnp.float32)
    var1 = jnp.ones((Cr,), jnp.float32)

    gamma2 = 1.0 + 0.1 * jax.random.normal(k_g2, (C,), dtype=jnp.float32)
    beta2 = 0.1 * jax.random.normal(k_b2, (C,), dtype=jnp.float32)
    mean2 = jnp.zeros((C,), jnp.float32)
    var2 = jnp.ones((C,), jnp.float32)

    # Fold BN into scale/shift (glue, outside the kernel).
    bn1_scale = gamma1 / jnp.sqrt(var1 + eps)
    bn1_bias = beta1 - mean1 * bn1_scale
    bn2_scale = gamma2 / jnp.sqrt(var2 + eps)
    bn2_bias = beta2 - mean2 * bn2_scale

    out = se_module(x, w1, bn1_scale, bn1_bias, w2, bn2_scale, bn2_bias)
    out = jax.block_until_ready(out)

    ref = _reference(x, w1, bn1_scale.reshape(1, Cr), bn1_bias.reshape(1, Cr),
                     w2, bn2_scale.reshape(1, C), bn2_bias.reshape(1, C))
    assert out.shape == (N, C, H, W)
    assert jnp.allclose(out, ref, atol=1e-4, rtol=1e-4), "mismatch vs reference"

    print("KERNEL_OK")
</pallas_src>

<mosaic_0001>
module attributes {stable_mosaic.version = 11 : i64} {
  func.func @_se_kernel(%arg0: i32, %arg1: memref<3x16x49xf32, #tpu.memory_space<vmem>>, %arg2: memref<16x4xf32, #tpu.memory_space<vmem>>, %arg3: memref<1x4xf32, #tpu.memory_space<vmem>>, %arg4: memref<4x16xf32, #tpu.memory_space<vmem>>, %arg5: memref<1x16xf32, #tpu.memory_space<vmem>>, %arg6: memref<3x16x49xf32, #tpu.memory_space<vmem>>) attributes {dimension_semantics = [#tpu.dimension_semantics<parallel>], iteration_bounds = array<i64: 2>, scalar_prefetch = 0 : i64, scratch_operands = 0 : i64, tpu.core_type = #tpu.core_type<tc>, window_params = [{transform_indices = @transform_0, window_bounds = array<i64: 3, 16, 49>}, {pipeline_mode = #tpu.pipeline_mode<synchronous>, transform_indices = @transform_1, window_bounds = array<i64: 16, 4>}, {pipeline_mode = #tpu.pipeline_mode<synchronous>, transform_indices = @transform_2, window_bounds = array<i64: 1, 4>}, {pipeline_mode = #tpu.pipeline_mode<synchronous>, transform_indices = @transform_3, window_bounds = array<i64: 4, 16>}, {pipeline_mode = #tpu.pipeline_mode<synchronous>, transform_indices = @transform_4, window_bounds = array<i64: 1, 16>}, {transform_indices = @transform_5, window_bounds = array<i64: 3, 16, 49>}]} {
    %c0 = arith.constant 0 : index
    %c0_0 = arith.constant 0 : index
    %c0_1 = arith.constant 0 : index
    %0 = vector.load %arg1[%c0, %c0_0, %c0_1] : memref<3x16x49xf32, #tpu.memory_space<vmem>>, vector<3x16x49xf32>
    %cst = arith.constant dense<0.000000e+00> : vector<3x16xf32>
    %1 = vector.multi_reduction <add>, %0, %cst [2] : vector<3x16x49xf32> to vector<3x16xf32>
    %cst_2 = arith.constant 0.0204081628 : f32
    %2 = vector.broadcast %cst_2 : f32 to vector<3x16xf32>
    %3 = arith.mulf %1, %2 : vector<3x16xf32>
    %c0_3 = arith.constant 0 : index
    %c0_4 = arith.constant 0 : index
    %4 = vector.load %arg2[%c0_3, %c0_4] : memref<16x4xf32, #tpu.memory_space<vmem>>, vector<16x4xf32>
    %cst_5 = arith.constant dense<0.000000e+00> : vector<3x4xf32>
    %5 = tpu.matmul %3, %4, %cst_5 {dimension_numbers = #tpu.dot_dimension_numbers<[1], [0], [0], [1], [0, 0, 1, 1], [], []>} : vector<3x16xf32>, vector<16x4xf32>, vector<3x4xf32> -> vector<3x4xf32>
    %c0_6 = arith.constant 0 : index
    %c0_7 = arith.constant 0 : index
    %6 = vector.load %arg3[%c0_6, %c0_7] : memref<1x4xf32, #tpu.memory_space<vmem>>, vector<1x4xf32>
    %7 = vector.broadcast %6 : vector<1x4xf32> to vector<3x4xf32>
    %8 = arith.addf %5, %7 : vector<3x4xf32>
    %cst_8 = arith.constant 0.000000e+00 : f32
    %9 = vector.broadcast %cst_8 : f32 to vector<3x4xf32>
    %10 = arith.maximumf %8, %9 : vector<3x4xf32>
    %c0_9 = arith.constant 0 : index
    %c0_10 = arith.constant 0 : index
    %11 = vector.load %arg4[%c0_9, %c0_10] : memref<4x16xf32, #tpu.memory_space<vmem>>, vector<4x16xf32>
    %cst_11 = arith.constant dense<0.000000e+00> : vector<3x16xf32>
    %12 = tpu.matmul %10, %11, %cst_11 {dimension_numbers = #tpu.dot_dimension_numbers<[1], [0], [0], [1], [0, 0, 1, 1], [], []>} : vector<3x4xf32>, vector<4x16xf32>, vector<3x16xf32> -> vector<3x16xf32>
    %c0_12 = arith.constant 0 : index
    %c0_13 = arith.constant 0 : index
    %13 = vector.load %arg5[%c0_12, %c0_13] : memref<1x16xf32, #tpu.memory_space<vmem>>, vector<1x16xf32>
    %14 = vector.broadcast %13 : vector<1x16xf32> to vector<3x16xf32>
    %15 = arith.addf %12, %14 : vector<3x16xf32>
    %cst_14 = arith.constant 3.000000e+00 : f32
    %16 = vector.broadcast %cst_14 : f32 to vector<3x16xf32>
    %17 = arith.addf %15, %16 : vector<3x16xf32>
    %cst_15 = arith.constant 0.000000e+00 : f32
    %cst_16 = arith.constant 6.000000e+00 : f32
    %18 = vector.broadcast %cst_15 : f32 to vector<3x16xf32>
    %19 = arith.maximumf %18, %17 : vector<3x16xf32>
    %20 = vector.broadcast %cst_16 : f32 to vector<3x16xf32>
    %21 = arith.minimumf %20, %19 : vector<3x16xf32>
    %cst_17 = arith.constant 0.166666672 : f32
    %22 = vector.broadcast %cst_17 : f32 to vector<3x16xf32>
    %23 = arith.mulf %21, %22 : vector<3x16xf32>
    %c0_18 = arith.constant 0 : index
    %c0_19 = arith.constant 0 : index
    %c0_20 = arith.constant 0 : index
    %24 = vector.load %arg1[%c0_18, %c0_19, %c0_20] : memref<3x16x49xf32, #tpu.memory_space<vmem>>, vector<3x16x49xf32>
    %25 = vector.shape_cast %23 : vector<3x16xf32> to vector<3x16x1xf32>
    %26 = vector.broadcast %25 : vector<3x16x1xf32> to vector<3x16x49xf32>
    %27 = arith.mulf %24, %26 : vector<3x16x49xf32>
    %c0_21 = arith.constant 0 : index
    %c0_22 = arith.constant 0 : index
    %c0_23 = arith.constant 0 : index
    %28 = vector.load %arg6[%c0_21, %c0_22, %c0_23] : memref<3x16x49xf32, #tpu.memory_space<vmem>>, vector<3x16x49xf32>
    tpu.vector_store %arg6[%c0_21, %c0_22, %c0_23], %27 {strides = array<i32>} : memref<3x16x49xf32, #tpu.memory_space<vmem>>, vector<3x16x49xf32>,
    return
  }
  func.func @transform_0(%arg0: i32) -> (i32, i32, i32) {
    %c0_i32 = arith.constant 0 : i32
    %c0_i32_0 = arith.constant 0 : i32
    %c0_i32_1 = arith.constant 0 : i32
    return %arg0, %c0_i32, %c0_i32_0 : i32, i32, i32
  }
  func.func @transform_1(%arg0: i32) -> (i32, i32) {
    %c0_i32 = arith.constant 0 : i32
    %c0_i32_0 = arith.constant 0 : i32
    %c0_i32_1 = arith.constant 0 : i32
    return %c0_i32, %c0_i32_0 : i32, i32
  }
  func.func @transform_2(%arg0: i32) -> (i32, i32) {
    %c0_i32 = arith.constant 0 : i32
    %c0_i32_0 = arith.constant 0 : i32
    %c0_i32_1 = arith.constant 0 : i32
    return %c0_i32, %c0_i32_0 : i32, i32
  }
  func.func @transform_3(%arg0: i32) -> (i32, i32) {
    %c0_i32 = arith.constant 0 : i32
    %c0_i32_0 = arith.constant 0 : i32
    %c0_i32_1 = arith.constant 0 : i32
    return %c0_i32, %c0_i32_0 : i32, i32
  }
  func.func @transform_4(%arg0: i32) -> (i32, i32) {
    %c0_i32 = arith.constant 0 : i32
    %c0_i32_0 = arith.constant 0 : i32
    %c0_i32_1 = arith.constant 0 : i32
    return %c0_i32, %c0_i32_0 : i32, i32
  }
  func.func @transform_5(%arg0: i32) -> (i32, i32, i32) {
    %c0_i32 = arith.constant 0 : i32
    %c0_i32_0 = arith.constant 0 : i32
    %c0_i32_1 = arith.constant 0 : i32
    return %arg0, %c0_i32, %c0_i32_0 : i32, i32, i32
  }
}

</mosaic_0001>

<llo_original>
// kernel: tpu_custom_call.1
$region0: #{tpu_custom_call.1}
  #allocation0 [shape = 'u32[]', space=smem, size = 0x4, offset = 0x4, fixed_abs, tag = 'smem constant byte address 0x4 - core index']
  #allocation1 [shape = 'u32[144,128]{1,0:T(1,128)}', space=vmem, size = 0x12000, scoped, tag = 'internal scratch']
  %s0 = inlined_call_operand.hbm [shape: f32[5,16,49], index: 0, kind: input, shape index: {}]
  %s1 = inlined_call_operand.hbm [shape: f32[16,4], index: 1, kind: input, shape index: {}]
  %s2 = inlined_call_operand.hbm [shape: f32[1,4], index: 2, kind: input, shape index: {}]
  %s3 = inlined_call_operand.hbm [shape: f32[4,16], index: 3, kind: input, shape index: {}]
  %s4 = inlined_call_operand.hbm [shape: f32[1,16], index: 4, kind: input, shape index: {}]
  %s5 = inlined_call_operand.hbm [shape: f32[5,16,49], index: 5, kind: output, shape index: {}]
  %s6 = sld [smem:[#allocation0]]
  $region73: #{tpu_custom_call.1} parent=0
    _
  %s8 = ssub.s32 1, %s6
  %s9 = scalar_select 0, %s8, %s6
  $region1: #{tpu_custom_call.1} parent=0
    #allocation2 [shape = 'u8[49152]{0}', space=vmem, size = 0xc000, scoped, tag = 'input window, operand 0']
    #allocation3 [shape = 's32[2]{0}', space=sflag, size = 0x8, scoped, tag = 'scoped memory for tpu_custom_call.1']
    #allocation4 [shape = 's32[2]{0}', space=sflag, size = 0x8, scoped, tag = 'scoped memory for tpu_custom_call.1']
    #allocation5 [shape = 'u8[8192]{0}', space=vmem, size = 0x2000, scoped, tag = 'input window, operand 1, single buffered']
    #allocation6 [shape = 's32[1]{0}', space=sflag, size = 0x4, scoped, tag = 'scoped memory for tpu_custom_call.1']
    #allocation7 [shape = 'u8[512]{0}', space=vmem, size = 0x400, scoped, tag = 'input window, operand 2, single buffered']
    #allocation8 [shape = 'u8[2048]{0}', space=vmem, size = 0x800, scoped, tag = 'input window, operand 3, single buffered']
    #allocation9 [shape = 's32[1]{0}', space=sflag, size = 0x4, scoped, tag = 'scoped memory for tpu_custom_call.1']
    #allocation10 [shape = 'u8[512]{0}', space=vmem, size = 0x400, scoped, tag = 'input window, operand 4, single buffered']
    #allocation11 [shape = 'u8[49152]{0}', space=vmem, size = 0xc000, scoped, tag = 'output window, operand 0']
    %10 = vsyncpa [#allocation3], 0
    %s11 = scalar_lea.sflag [#allocation3], 1
    %12 = vsyncpa %s11, 0
    %13 = vsyncpa [#allocation6], 0
    %14 = vsyncpa [#allocation9], 0
    %15 = vsyncpa [#allocation4], 0
    %s16 = scalar_lea.sflag [#allocation4], 1
    %17 = vsyncpa %s16, 0
    loop: start=0, step=1, limit=4
    $region2: #{tpu_custom_call.1} parent=1 // loop_pre_header
      _
    $region3: #{tpu_custom_call.1} parent=1 // loop_header
      %s19 = sphi 0, %s23
      %p20 = scmp.ge.s32.totalorder %s19, 4
      %s29 = sphi 0, %s31
      %s32 = sphi 0, %s29
      %s33 = sphi 0, %s32
      %s49 = sphi 0, %s33
      %s53 = sphi 0, %s53
      %s55 = sphi 0, %s53
      %s56 = sphi 0, %s55
      %s70 = sphi 0, %s56
      %s74 = sphi 0, %s74
      %s76 = sphi 0, %s74
      %s77 = sphi 0, %s76
      %s91 = sphi 0, %s77
      %s95 = sphi 0, %s95
      %s97 = sphi 0, %s95
      %s98 = sphi 0, %s97
      %s112 = sphi 0, %s98
      %s116 = sphi 0, %s116
      %s118 = sphi 0, %s116
      %s119 = sphi 0, %s118
      %s133 = sphi 0, %s119
      %s139 = sphi 0, %s141
      %s142 = sphi 0, %s139
      %s143 = sphi 0, %s142
      %s159 = sphi 0, %s143
    $region4: #{tpu_custom_call.1} parent=1 // loop_header_branch
      %22 = sbr.rel (%p20) target = $region8
    $region5: #{tpu_custom_call.1} parent=1 // loop_body
      %s24 = ssub.s32 %s19, 1
      %s25 = ssub.s32 %s19, 2
      %s26 = sadd.s32 %s19, 1
      %s27 = ssub.s32 %s19, %s26
      %p28 = scmp.eq.s32.totalorder %s27, 0
      %s30 = sadd.s32 %s29, 1
      %s31 = scalar_select %p28, %s29, %s30
      %p34 = pneg %p28
      %p35 = scmp.eq.s32.totalorder %s19, 1
      %p36 = por %p34, %p35
      %p37 = scmp.ne.s32.totalorder %s29, %s32
      %p38 = scmp.eq.s32.totalorder %s19, 0
      %p39 = por %p37, %p38
      %p40 = scmp.ne.s32.totalorder %s29, %s32
      %p41 = scmp.eq.s32.totalorder %s24, 1
      %p42 = por %p40, %p41
      %p43 = scmp.ne.s32.totalorder %s32, %s33
      %p44 = scmp.eq.s32.totalorder %s24, 0
      %p45 = por %p43, %p44
      %p46 = scmp.ne.s32.totalorder %s32, %s33
      %p47 = scmp.eq.s32.totalorder %s25, 1
      %p48 = por %p46, %p47
      %p50 = scmp.ne.s32.totalorder %s33, %s49
      %p51 = scmp.eq.s32.totalorder %s25, 0
      %p52 = por %p50, %p51
      %s54 = sadd.s32 %s53, 1
      %p57 = scmp.eq.s32.totalorder %s19, 1
      %p58 = scmp.ne.s32.totalorder %s53, %s55
      %p59 = scmp.eq.s32.totalorder %s19, 0
      %p60 = por %p58, %p59
      %p61 = scmp.ne.s32.totalorder %s53, %s55
      %p62 = scmp.eq.s32.totalorder %s24, 1
      %p63 = por %p61, %p62
      %p64 = scmp.ne.s32.totalorder %s55, %s56
      %p65 = scmp.eq.s32.totalorder %s24, 0
      %p66 = por %p64, %p65
      %p67 = scmp.ne.s32.totalorder %s55, %s56
      %p68 = scmp.eq.s32.totalorder %s25, 1
      %p69 = por %p67, %p68
      %p71 = scmp.ne.s32.totalorder %s56, %s70
      %p72 = scmp.eq.s32.totalorder %s25, 0
      %p73 = por %p71, %p72
      %s75 = sadd.s32 %s74, 1
      %p78 = scmp.eq.s32.totalorder %s19, 1
      %p79 = scmp.ne.s32.totalorder %s74, %s76
      %p80 = scmp.eq.s32.totalorder %s19, 0
      %p81 = por %p79, %p80
      %p82 = scmp.ne.s32.totalorder %s74, %s76
      %p83 = scmp.eq.s32.totalorder %s24, 1
      %p84 = por %p82, %p83
      %p85 = scmp.ne.s32.totalorder %s76, %s77
      %p86 = scmp.eq.s32.totalorder %s24, 0
      %p87 = por %p85, %p86
      %p88 = scmp.ne.s32.totalorder %s76, %s77
      %p89 = scmp.eq.s32.totalorder %s25, 1
      %p90 = por %p88, %p89
      %p92 = scmp.ne.s32.totalorder %s77, %s91
      %p93 = scmp.eq.s32.totalorder %s25, 0
      %p94 = por %p92, %p93
      %s96 = sadd.s32 %s95, 1
      %p99 = scmp.eq.s32.totalorder %s19, 1
      %p100 = scmp.ne.s32.totalorder %s95, %s97
      %p101 = scmp.eq.s32.totalorder %s19, 0
      %p102 = por %p100, %p101
      %p103 = scmp.ne.s32.totalorder %s95, %s97
      %p104 = scmp.eq.s32.totalorder %s24, 1
      %p105 = por %p103, %p104
      %p106 = scmp.ne.s32.totalorder %s97, %s98
      %p107 = scmp.eq.s32.totalorder %s24, 0
      %p108 = por %p106, %p107
      %p109 = scmp.ne.s32.totalorder %s97, %s98
      %p110 = scmp.eq.s32.totalorder %s25, 1
      %p111 = por %p109, %p110
      %p113 = scmp.ne.s32.totalorder %s98, %s112
      %p114 = scmp.eq.s32.totalorder %s25, 0
      %p115 = por %p113, %p114
      %s117 = sadd.s32 %s116, 1
      %p120 = scmp.eq.s32.totalorder %s19, 1
      %p121 = scmp.ne.s32.totalorder %s116, %s118
      %p122 = scmp.eq.s32.totalorder %s19, 0
      %p123 = por %p121, %p122
      %p124 = scmp.ne.s32.totalorder %s116, %s118
      %p125 = scmp.eq.s32.totalorder %s24, 1
      %p126 = por %p124, %p125
      %p127 = scmp.ne.s32.totalorder %s118, %s119
      %p128 = scmp.eq.s32.totalorder %s24, 0
      %p129 = por %p127, %p128
      %p130 = scmp.ne.s32.totalorder %s118, %s119
      %p131 = scmp.eq.s32.totalorder %s25, 1
      %p132 = por %p130, %p131
      %p134 = scmp.ne.s32.totalorder %s119, %s133
      %p135 = scmp.eq.s32.totalorder %s25, 0
      %p136 = por %p134, %p135
      %s137 = ssub.s32 %s19, %s26
      %p138 = scmp.eq.s32.totalorder %s137, 0
      %s140 = sadd.s32 %s139, 1
      %s141 = scalar_select %p138, %s139, %s140
      %p144 = pneg %p138
      %p145 = scmp.eq.s32.totalorder %s19, 1
      %p146 = por %p144, %p145
      %p147 = scmp.ne.s32.totalorder %s139, %s142
      %p148 = scmp.eq.s32.totalorder %s19, 0
      %p149 = por %p147, %p148
      %p150 = scmp.ne.s32.totalorder %s139, %s142
      %p151 = scmp.eq.s32.totalorder %s24, 1
      %p152 = por %p150, %p151
      %p153 = scmp.ne.s32.totalorder %s142, %s143
      %p154 = scmp.eq.s32.totalorder %s24, 0
      %p155 = por %p153, %p154
      %p156 = scmp.ne.s32.totalorder %s142, %s143
      %p157 = scmp.eq.s32.totalorder %s25, 1
      %p158 = por %p156, %p157
      %p160 = scmp.ne.s32.totalorder %s143, %s159
      %p161 = scmp.eq.s32.totalorder %s25, 0
      %p162 = por %p160, %p161
      %p163 = scmp.le.s32.totalorder 1, %s19
      %p164 = scmp.lt.s32.totalorder %s19, 3
      %p165 = pnand %p163, %p164
      %p166 = pneg %p165
      // Predicated region
      $region9: #{tpu_custom_call.1} parent=5 // pred_check
        _
      $region10: #{tpu_custom_call.1} parent=5 // pred_check_branch
        %168 = sbr.rel (%p165) target = $region12
      $region11: #{tpu_custom_call.1} parent=5 // pred_region
        %s169 = ssub.s32 %s19, 1
        // Predicated region
        $region13: #{tpu_custom_call.1} parent=11 // pred_check
          %p170 = pneg %p66
        $region14: #{tpu_custom_call.1} parent=11 // pred_check_branch
          %172 = sbr.rel (%p170) target = $region16
        $region15: #{tpu_custom_call.1} parent=11 // pred_region
          %s174 = ssub.s32 256, 256
          %175 = vsyncadd [#allocation6], %s174
          %s176 = sshll.u32 [#allocation5], 4
          %s177 = int_to_ptr.vmem [resolvable:$true] %s176
          %182 = dma.hbm_to_vmem [thread:$0]  %s1, 256, %s177, [#allocation6], 128, 128, 8
        $region16: #{tpu_custom_call.1} parent=11 // pred_fallthru
          _
        // Predicated region
        $region17: #{tpu_custom_call.1} parent=11 // pred_check
          %p183 = pneg %p87
        $region18: #{tpu_custom_call.1} parent=11 // pred_check_branch
          %185 = sbr.rel (%p183) target = $region20
        $region19: #{tpu_custom_call.1} parent=11 // pred_region
          %s187 = ssub.s32 16, 16
          %188 = vsyncadd [#allocation6], %s187
          %s190 = sshll.u32 [#allocation7], 4
          %s191 = int_to_ptr.vmem [resolvable:$true] %s190
          %193 = dma.hbm_to_vmem [thread:$0]  %s2, 16, %s191, [#allocation6]
        $region20: #{tpu_custom_call.1} parent=11 // pred_fallthru
          _
        // Predicated region
        $region21: #{tpu_custom_call.1} parent=11 // pred_check
          %p194 = pneg %p108
        $region22: #{tpu_custom_call.1} parent=11 // pred_check_branch
          %196 = sbr.rel (%p194) target = $region24
        $region23: #{tpu_custom_call.1} parent=11 // pred_region
          %s198 = ssub.s32 64, 64
          %199 = vsyncadd [#allocation9], %s198
          %s201 = sshll.u32 [#allocation8], 4
          %s202 = int_to_ptr.vmem [resolvable:$true] %s201
          %204 = dma.hbm_to_vmem [thread:$0]  %s3, 64, %s202, [#allocation9]
        $region24: #{tpu_custom_call.1} parent=11 // pred_fallthru
          _
        // Predicated region
        $region25: #{tpu_custom_call.1} parent=11 // pred_check
          %p205 = pneg %p129
        $region26: #{tpu_custom_call.1} parent=11 // pred_check_branch
          %207 = sbr.rel (%p205) target = $region28
        $region27: #{tpu_custom_call.1} parent=11 // pred_region
          %s209 = ssub.s32 16, 16
          %210 = vsyncadd [#allocation9], %s209
          %s212 = sshll.u32 [#allocation10], 4
          %s213 = int_to_ptr.vmem [resolvable:$true] %s212
          %215 = dma.hbm_to_vmem [thread:$0]  %s4, 16, %s213, [#allocation9]
        $region28: #{tpu_custom_call.1} parent=11 // pred_fallthru
          _
      $region12: #{tpu_custom_call.1} parent=5 // pred_fallthru
        _
      %p216 = scmp.lt.s32.totalorder %s19, 2
      // Predicated region
      $region29: #{tpu_custom_call.1} parent=5 // pred_check
        %p217 = pneg %p216
      $region30: #{tpu_custom_call.1} parent=5 // pred_check_branch
        %219 = sbr.rel (%p217) target = $region32
      $region31: #{tpu_custom_call.1} parent=5 // pred_region
        // Predicated region
        $region33: #{tpu_custom_call.1} parent=31 // pred_check
          %p220 = pneg %p39
        $region34: #{tpu_custom_call.1} parent=31 // pred_check_branch
          %222 = sbr.rel (%p220) target = $region36
        $region35: #{tpu_custom_call.1} parent=31 // pred_region
          %s223 = sand.u32 %s29, 1
          %s224 = scalar_lea.sflag [#allocation3], %s223
          %s225 = sand.u32 %s29, 1
          %s226 = smul.addr %s225, 48
          %s227 = scalar_lea.vmem [#allocation2], %s226
          %s228 = smul.u32 3, %s19
          %s229 = ssub.s32 5, %s228
          %p230 = scmp.lt.s32.totalorder %s229, 3
          %s231 = scalar_select %p230, %s229, 3
          %s232 = smul.u32 128, %s231
          %s233 = smul.u32 %s232, 2
          %s235 = ssub.s32 768, %s233
          %236 = vsyncadd %s224, %s235
          %p237 = scmp.ne.s32.totalorder 0, %s233
          %s238 = smul.addr %s228, 2
          %s239 = smul.addr %s238, 128
          %s240 = scalar_lea.hbm %s0, %s239
          %s241 = smul.u32 %s231, 2
          %s242 = smul.u32 8, %s241
          %s243 = sshll.u32 %s227, 4
          %s244 = int_to_ptr.vmem [resolvable:$true] %s243
          %s245 = sshll.u32 %s242, 4
          %249 = dma.hbm_to_vmem [thread:$0]  (%p237), %s240, %s245, %s244, %s224, 128, 128, 8
        $region36: #{tpu_custom_call.1} parent=31 // pred_fallthru
          _
      $region32: #{tpu_custom_call.1} parent=5 // pred_fallthru
        _
      %p250 = scmp.le.s32.totalorder 1, %s19
      %p251 = scmp.lt.s32.totalorder %s19, 3
      %p252 = pnand %p250, %p251
      %p253 = pneg %p252
      // Predicated region
      $region37: #{tpu_custom_call.1} parent=5 // pred_check
        _
      $region38: #{tpu_custom_call.1} parent=5 // pred_check_branch
        %255 = sbr.rel (%p252) target = $region40
      $region39: #{tpu_custom_call.1} parent=5 // pred_region
        %s256 = ssub.s32 %s19, 1
        %s257 = sand.u32 %s32, 1
        %s258 = scalar_lea.sflag [#allocation3], %s257
        %s259 = sand.u32 %s32, 1
        %s260 = smul.addr %s259, 48
        %s261 = scalar_lea.vmem [#allocation2], %s260
        // Predicated region
        $region41: #{tpu_custom_call.1} parent=39 // pred_check
          %p262 = pneg %p45
        $region42: #{tpu_custom_call.1} parent=39 // pred_check_branch
          %264 = sbr.rel (%p262) target = $region44
        $region43: #{tpu_custom_call.1} parent=39 // pred_region
          %265 = dma.done %s258, 768
        $region44: #{tpu_custom_call.1} parent=39 // pred_fallthru
          _
        // Predicated region
        $region45: #{tpu_custom_call.1} parent=39 // pred_check
          %p266 = pneg %p66
        $region46: #{tpu_custom_call.1} parent=39 // pred_check_branch
          %268 = sbr.rel (%p266) target = $region48
        $region47: #{tpu_custom_call.1} parent=39 // pred_region
          %269 = dma.done [#allocation6], 256
        $region48: #{tpu_custom_call.1} parent=39 // pred_fallthru
          _
        // Predicated region
        $region49: #{tpu_custom_call.1} parent=39 // pred_check
          %p270 = pneg %p87
        $region50: #{tpu_custom_call.1} parent=39 // pred_check_branch
          %272 = sbr.rel (%p270) target = $region52
        $region51: #{tpu_custom_call.1} parent=39 // pred_region
          %273 = dma.done [#allocation6], 16
        $region52: #{tpu_custom_call.1} parent=39 // pred_fallthru
          _
        // Predicated region
        $region53: #{tpu_custom_call.1} parent=39 // pred_check
          %p274 = pneg %p108
        $region54: #{tpu_custom_call.1} parent=39 // pred_check_branch
          %276 = sbr.rel (%p274) target = $region56
        $region55: #{tpu_custom_call.1} parent=39 // pred_region
          %277 = dma.done [#allocation9], 64
        $region56: #{tpu_custom_call.1} parent=39 // pred_fallthru
          _
        // Predicated region
        $region57: #{tpu_custom_call.1} parent=39 // pred_check
          %p278 = pneg %p129
        $region58: #{tpu_custom_call.1} parent=39 // pred_check_branch
          %280 = sbr.rel (%p278) target = $region60
        $region59: #{tpu_custom_call.1} parent=39 // pred_region
          %281 = dma.done [#allocation9], 16
        $region60: #{tpu_custom_call.1} parent=39 // pred_fallthru
          _
        %s282 = sand.u32 %s32, 1
        %s283 = scalar_lea.sflag [#allocation3], %s282
        %s284 = sand.u32 %s32, 1
        %s285 = smul.addr %s284, 48
        %s286 = scalar_lea.vmem [#allocation2], %s285
        %p287 = pneg %p45
        %p288 = pneg %p42
        %p289 = pneg %p66
        %p290 = pneg %p63
        %p291 = pneg %p87
        %p292 = pneg %p84
        %p293 = pneg %p108
        %p294 = pneg %p105
        %p295 = pneg %p129
        %p296 = pneg %p126
        %p297 = pneg %p155
        %p298 = pneg %p152
        %s299 = sand.u32 %s142, 1
        %s300 = scalar_lea.sflag [#allocation4], %s299
        %s301 = sand.u32 %s142, 1
        %s302 = smul.addr %s301, 48
        %s303 = scalar_lea.vmem [#allocation11], %s302
        %s304 = smul.u32 3, %s24
        %s305 = ssub.s32 5, %s304
        %p306 = scmp.lt.s32.totalorder %s305, 3
        %s307 = scalar_select %p306, %s305, 3
        %s308 = smul.u32 128, %s307
        %s309 = smul.u32 %s308, 2
        %s310 = smul.u32 3, %s24
        %s311 = ssub.s32 5, %s310
        %p312 = scmp.lt.s32.totalorder %s311, 3
        %s313 = scalar_select %p312, %s311, 3
        %s314 = smul.u32 128, %s313
        %s315 = smul.u32 %s314, 2
        %v316 = vld [vmem:[%s261] sm:$0xff]
        %v317 = vld [vmem:[%s261 + $0x8] sm:$0xff]
        %v318 = vld [vmem:[%s261 + $0x10] sm:$0xff]
        %v319 = vld [vmem:[%s261 + $0x18] sm:$0xff]
        %v320 = vld [vmem:[%s261 + $0x20] sm:$0xff]
        %v321 = vld [vmem:[%s261 + $0x28] sm:$0xff]
        %vm322 = vcmask 400384
        %v323 = vsel %vm322, %v316, 0.0
        %324 = vadd.xlane.f32.xlu0 %v323
        %v325 = vpop.xlane.xlu0 %324
        %v326 = vsel %vm322, %v317, 0.0
        %327 = vadd.xlane.f32.xlu0 %v326
        %v328 = vpop.xlane.xlu0 %327
        %v329 = vsel %vm322, %v318, 0.0
        %330 = vadd.xlane.f32.xlu0 %v329
        %v331 = vpop.xlane.xlu0 %330
        %v332 = vsel %vm322, %v319, 0.0
        %333 = vadd.xlane.f32.xlu0 %v332
        %v334 = vpop.xlane.xlu0 %333
        %v335 = vsel %vm322, %v320, 0.0
        %336 = vadd.xlane.f32.xlu0 %v335
        %v337 = vpop.xlane.xlu0 %336
        %v338 = vsel %vm322, %v321, 0.0
        %339 = vadd.xlane.f32.xlu0 %v338
        %v340 = vpop.xlane.xlu0 %339
        %v341 = vmul.f32 %v325, 0.020408163
        %v342 = vmul.f32 %v328, 0.020408163
        %v343 = vmul.f32 %v331, 0.020408163
        %v344 = vmul.f32 %v334, 0.020408163
        %v345 = vmul.f32 %v337, 0.020408163
        %v346 = vmul.f32 %v340, 0.020408163
        %v347 = vld [vmem:[#allocation5] sm:$0xff]
        %v348 = vld [vmem:[#allocation5 + $0x8] sm:$0xff]
        %v349 = vld [vmem:[#allocation7] sm:$0x1]
        %v351 = vlaneseq
        %v352 = vshrl.u32 %v351, 7
        %v353 = vsub.s32 0, %v352
        %v354 = vrot.slane %v349, %v353
        %v362 = vlaneseq
        %v363 = vand.u32 %v362, 127
        %v364 = vlaneseq
        %v365 = vshrl.u32 %v364, 7
        %v366 = vsub.s32 %v363, %v365
        %v367 = vrot.slane %v341, %v366
        %v368 = vadd.s32 %v363, 4294967288
        %v369 = vlaneseq
        %v370 = vshrl.u32 %v369, 7
        %v371 = vsub.s32 %v368, %v370
        %v372 = vrot.slane %v342, %v371
        %vm373 = vcmask 130112
        %v374 = vsel %vm373, %v372, %v367
        %v375 = vlaneseq
        %v376 = vshrl.u32 %v375, 7
        %v377 = vsub.s32 %v363, %v376
        %v378 = vrot.slane %v343, %v377
        %v379 = vlaneseq
        %v380 = vshrl.u32 %v379, 7
        %v381 = vsub.s32 %v368, %v380
        %v382 = vrot.slane %v344, %v381
        %v383 = vsel %vm373, %v382, %v378
        %v384 = vlaneseq
        %v385 = vshrl.u32 %v384, 7
        %v386 = vsub.s32 %v363, %v385
        %v387 = vrot.slane %v345, %v386
        %v388 = vlaneseq
        %v389 = vshrl.u32 %v388, 7
        %v390 = vsub.s32 %v368, %v389
        %v391 = vrot.slane %v346, %v390
        %v392 = vsel %vm373, %v391, %v387
        %vm393 = vcmask 1041409
        %v394 = vsel %vm393, %v383, %v374
        %vm395 = vcmask 1042434
        %v396 = vsel %vm395, %v392, %v394
        %vm397 = vcmask 130048
        %v398 = vsel %vm397, %v396, 0
        %400 = vmatprep.subr.mxu0 0.0
        %401 = vmatpush1.msra.mxu0 %v347
        %402 = vmatprep.subr.mxu0 0.0
        %403 = vmatpush1.msra.mxu0 %v348
        %404 = vmatprep.subr.mxu0 0.0
        %405 = vmatpush1.msra.mxu0 0.0
        %406 = vmatprep.subr.mxu0 0.0
        %407 = vmatpush1.msra.mxu0 0.0
        %408 = vmatprep.subr.mxu0 0.0
        %409 = vmatpush1.msra.mxu0 0.0
        %410 = vmatprep.subr.mxu0 0.0
        %411 = vmatpush1.msra.mxu0 0.0
        %412 = vmatprep.subr.mxu0 0.0
        %413 = vmatpush1.msra.mxu0 0.0
        %414 = vmatprep.subr.mxu0 0.0
        %415 = vmatpush1.msra.mxu0 0.0
        %416 = vmatprep.subr.mxu0 0.0
        %417 = vmatpush1.msra.mxu0 0.0
        %418 = vmatprep.subr.mxu0 0.0
        %419 = vmatpush1.msra.mxu0 0.0
        %420 = vmatprep.subr.mxu0 0.0
        %421 = vmatpush1.msra.mxu0 0.0
        %422 = vmatprep.subr.mxu0 0.0
        %423 = vmatpush1.msra.mxu0 0.0
        %424 = vmatprep.subr.mxu0 0.0
        %425 = vmatpush1.msra.mxu0 0.0
        %426 = vmatprep.subr.mxu0 0.0
        %427 = vmatpush1.msra.mxu0 0.0
        %428 = vmatprep.subr.mxu0 0.0
        %429 = vmatpush1.msra.mxu0 0.0
        %430 = vmatprep.subr.mxu0 0.0
        %431 = vmatpush1.msra.mxu0 0.0
        %432 = vmatprep.subr.mxu0 0.0
        %433 = vmatpush1.msra.mxu0 0.0
        %434 = vmatprep.subr.mxu0 0.0
        %435 = vmatpush1.msra.mxu0 0.0
        %436 = vmatprep.subr.mxu0 0.0
        %437 = vmatpush1.msra.mxu0 0.0
        %438 = vmatprep.subr.mxu0 0.0
        %439 = vmatpush1.msra.mxu0 0.0
        %440 = vmatprep.subr.mxu0 0.0
        %441 = vmatpush1.msra.mxu0 0.0
        %442 = vmatprep.subr.mxu0 0.0
        %443 = vmatpush1.msra.mxu0 0.0
        %444 = vmatprep.subr.mxu0 0.0
        %445 = vmatpush1.msra.mxu0 0.0
        %446 = vmatprep.subr.mxu0 0.0
        %447 = vmatpush1.msra.mxu0 0.0
        %448 = vmatprep.subr.mxu0 0.0
        %449 = vmatpush1.msra.mxu0 0.0
        %450 = vmatprep.subr.mxu0 0.0
        %451 = vmatpush1.msra.mxu0 0.0
        %452 = vmatprep.subr.mxu0 0.0
        %453 = vmatpush1.msra.mxu0 0.0
        %454 = vmatprep.subr.mxu0 0.0
        %455 = vmatpush1.msra.mxu0 0.0
        %456 = vmatprep.subr.mxu0 0.0
        %457 = vmatpush1.msra.mxu0 0.0
        %458 = vmatprep.subr.mxu0 0.0
        %459 = vmatpush1.msra.mxu0 0.0
        %460 = vmatprep.subr.mxu0 0.0
        %461 = vmatpush1.msra.mxu0 0.0
        %462 = vmatprep.subr.mxu0 0.0
        %463 = vmatpush1.msra.mxu0 0.0
        %464 = vmatprep.mubr.f32.mxu0 0.0
        %465 = vmatmul.mubr.f32.gmra.mrb[0].mxu0 %v398
        %v466 = vpop.f32.mrb[0].mxu0
        %v467 = vadd.f32 %v354, %v466
        %v468 = vpop.f32.mrb[0].mxu0
        %469 = vdwg.mxu0
        %v470 = vmax.f32 %v467, 0.0
        %v471 = vld [vmem:[#allocation8] sm:$0xf]
        %v472 = vld [vmem:[#allocation10] sm:$0x1]
        %v474 = vlaneseq
        %v475 = vshrl.u32 %v474, 7
        %v476 = vsub.s32 0, %v475
        %v477 = vrot.slane %v472, %v476
        %vm479 = vcmask 31744
        %v481 = vsel %vm479, %v470, 0
        %vm483 = vcmask 1043456
        %v485 = vsel %vm483, %v471, 0
        %487 = vmatprep.subr.mxu0 0.0
        %488 = vmatpush1.msra.mxu0 %v485
        %489 = vmatprep.subr.mxu0 0.0
        %490 = vmatpush1.msra.mxu0 0.0
        %491 = vmatprep.subr.mxu0 0.0
        %492 = vmatpush1.msra.mxu0 0.0
        %493 = vmatprep.subr.mxu0 0.0
        %494 = vmatpush1.msra.mxu0 0.0
        %495 = vmatprep.subr.mxu0 0.0
        %496 = vmatpush1.msra.mxu0 0.0
        %497 = vmatprep.subr.mxu0 0.0
        %498 = vmatpush1.msra.mxu0 0.0
        %499 = vmatprep.subr.mxu0 0.0
        %500 = vmatpush1.msra.mxu0 0.0
        %501 = vmatprep.subr.mxu0 0.0
        %502 = vmatpush1.msra.mxu0 0.0
        %503 = vmatprep.subr.mxu0 0.0
        %504 = vmatpush1.msra.mxu0 0.0
        %505 = vmatprep.subr.mxu0 0.0
        %506 = vmatpush1.msra.mxu0 0.0
        %507 = vmatprep.subr.mxu0 0.0
        %508 = vmatpush1.msra.mxu0 0.0
        %509 = vmatprep.subr.mxu0 0.0
        %510 = vmatpush1.msra.mxu0 0.0
        %511 = vmatprep.subr.mxu0 0.0
        %512 = vmatpush1.msra.mxu0 0.0
        %513 = vmatprep.subr.mxu0 0.0
        %514 = vmatpush1.msra.mxu0 0.0
        %515 = vmatprep.subr.mxu0 0.0
        %516 = vmatpush1.msra.mxu0 0.0
        %517 = vmatprep.subr.mxu0 0.0
        %518 = vmatpush1.msra.mxu0 0.0
        %519 = vmatprep.subr.mxu0 0.0
        %520 = vmatpush1.msra.mxu0 0.0
        %521 = vmatprep.subr.mxu0 0.0
        %522 = vmatpush1.msra.mxu0 0.0
        %523 = vmatprep.subr.mxu0 0.0
        %524 = vmatpush1.msra.mxu0 0.0
        %525 = vmatprep.subr.mxu0 0.0
        %526 = vmatpush1.msra.mxu0 0.0
        %527 = vmatprep.subr.mxu0 0.0
        %528 = vmatpush1.msra.mxu0 0.0
        %529 = vmatprep.subr.mxu0 0.0
        %530 = vmatpush1.msra.mxu0 0.0
        %531 = vmatprep.subr.mxu0 0.0
        %532 = vmatpush1.msra.mxu0 0.0
        %533 = vmatprep.subr.mxu0 0.0
        %534 = vmatpush1.msra.mxu0 0.0
        %535 = vmatprep.subr.mxu0 0.0
        %536 = vmatpush1.msra.mxu0 0.0
        %537 = vmatprep.subr.mxu0 0.0
        %538 = vmatpush1.msra.mxu0 0.0
        %539 = vmatprep.subr.mxu0 0.0
        %540 = vmatpush1.msra.mxu0 0.0
        %541 = vmatprep.subr.mxu0 0.0
        %542 = vmatpush1.msra.mxu0 0.0
        %543 = vmatprep.subr.mxu0 0.0
        %544 = vmatpush1.msra.mxu0 0.0
        %545 = vmatprep.subr.mxu0 0.0
        %546 = vmatpush1.msra.mxu0 0.0
        %547 = vmatprep.subr.mxu0 0.0
        %548 = vmatpush1.msra.mxu0 0.0
        %549 = vmatprep.subr.mxu0 0.0
        %550 = vmatpush1.msra.mxu0 0.0
        %551 = vmatprep.mubr.f32.mxu0 0.0
        %552 = vmatmul.mubr.f32.gmra.mrb[0].mxu0 %v481
        %v553 = vpop.f32.mrb[0].mxu0
        %v554 = vadd.f32 %v477, %v553
        %v555 = vpop.f32.mrb[0].mxu0
        %556 = vdwg.mxu0
        %v557 = vadd.f32 %v554, 3.0
        %v558 = vmax.f32 %v557, 0.0
        %v559 = vmin.f32 %v558, 6.0
        %v560 = vmul.f32 %v559, 0.16666667
        %v561 = vlaneseq
        %v562 = vshrl.u32 %v561, 7
        %v563 = vsub.s32 0, %v562
        %v564 = vrot.slane %v560, %v563
        %566 = vbcast.lane.b32.xlu0 %v564, 256
        %v567 = vpop.permute.xlu0 %566
        %s569 = sor.u32 256, 8
        %570 = vbcast.lane.b32.xlu0 %v564, %s569
        %v571 = vpop.permute.xlu0 %570
        %v572 = vlaneseq
        %v573 = vshrl.u32 %v572, 7
        %v574 = vsub.s32 1, %v573
        %v575 = vrot.slane %v560, %v574
        %577 = vbcast.lane.b32.xlu0 %v575, 256
        %v578 = vpop.permute.xlu0 %577
        %s580 = sor.u32 256, 8
        %581 = vbcast.lane.b32.xlu0 %v575, %s580
        %v582 = vpop.permute.xlu0 %581
        %v583 = vlaneseq
        %v584 = vshrl.u32 %v583, 7
        %v585 = vsub.s32 2, %v584
        %v586 = vrot.slane %v560, %v585
        %588 = vbcast.lane.b32.xlu0 %v586, 256
        %v589 = vpop.permute.xlu0 %588
        %s591 = sor.u32 256, 8
        %592 = vbcast.lane.b32.xlu0 %v586, %s591
        %v593 = vpop.permute.xlu0 %592
        %v594 = vmul.f32 %v316, %v567
        %v595 = vmul.f32 %v317, %v571
        %v596 = vmul.f32 %v318, %v578
        %v597 = vmul.f32 %v319, %v582
        %v598 = vmul.f32 %v320, %v589
        %v599 = vmul.f32 %v321, %v593
        %600 = vst.msk [vmem:[%s303] sm:$0xff] %vm322, %v594
        %601 = vst.msk [vmem:[%s303 + $0x8] sm:$0xff] %vm322, %v595
        %602 = vst.msk [vmem:[%s303 + $0x10] sm:$0xff] %vm322, %v596
        %603 = vst.msk [vmem:[%s303 + $0x18] sm:$0xff] %vm322, %v597
        %604 = vst.msk [vmem:[%s303 + $0x20] sm:$0xff] %vm322, %v598
        %605 = vst.msk [vmem:[%s303 + $0x28] sm:$0xff] %vm322, %v599
        %s606 = sand.u32 %s142, 1
        %s607 = scalar_lea.sflag [#allocation4], %s606
        %s608 = sand.u32 %s142, 1
        %s609 = smul.addr %s608, 48
        %s610 = scalar_lea.vmem [#allocation11], %s609
        // Predicated region
        $region61: #{tpu_custom_call.1} parent=39 // pred_check
          %p611 = pneg %p152
        $region62: #{tpu_custom_call.1} parent=39 // pred_check_branch
          %613 = sbr.rel (%p611) target = $region64
        $region63: #{tpu_custom_call.1} parent=39 // pred_region
          %s614 = smul.u32 3, %s24
          %s615 = ssub.s32 5, %s614
          %p616 = scmp.lt.s32.totalorder %s615, 3
          %s617 = scalar_select %p616, %s615, 3
          %s618 = smul.u32 128, %s617
          %s619 = smul.u32 %s618, 2
          %s621 = ssub.s32 768, %s619
          %622 = vsyncadd %s607, %s621
          %p623 = scmp.ne.s32.totalorder 0, %s619
          %s624 = smul.addr %s614, 2
          %s625 = smul.addr %s624, 128
          %s626 = scalar_lea.hbm %s5, %s625
          %s627 = smul.u32 %s617, 2
          %s628 = smul.u32 8, %s627
          %s629 = sshll.u32 %s610, 4
          %s630 = int_to_ptr.vmem [resolvable:$true] %s629
          %s631 = sshll.u32 %s628, 4
          %635 = dma.vmem_to_hbm [thread:$0]  (%p623), %s630, %s631, %s626, %s607, 128, 128, 8
        $region64: #{tpu_custom_call.1} parent=39 // pred_fallthru
          _
      $region40: #{tpu_custom_call.1} parent=5 // pred_fallthru
        _
      %p636 = scmp.le.s32.totalorder 2, %s19
      // Predicated region
      $region65: #{tpu_custom_call.1} parent=5 // pred_check
        %p637 = pneg %p636
      $region66: #{tpu_custom_call.1} parent=5 // pred_check_branch
        %639 = sbr.rel (%p637) target = $region68
      $region67: #{tpu_custom_call.1} parent=5 // pred_region
        %s640 = ssub.s32 %s19, 2
        // Predicated region
        $region69: #{tpu_custom_call.1} parent=67 // pred_check
          %p641 = pneg %p158
        $region70: #{tpu_custom_call.1} parent=67 // pred_check_branch
          %643 = sbr.rel (%p641) target = $region72
        $region71: #{tpu_custom_call.1} parent=67 // pred_region
          %s644 = sand.u32 %s143, 1
          %s645 = scalar_lea.sflag [#allocation4], %s644
          %s646 = sand.u32 %s143, 1
          %s647 = smul.addr %s646, 48
          %s648 = scalar_lea.vmem [#allocation11], %s647
          %649 = dma.done %s645, 768
        $region72: #{tpu_custom_call.1} parent=67 // pred_fallthru
          _
      $region68: #{tpu_custom_call.1} parent=5 // pred_fallthru
        _
    $region6: #{tpu_custom_call.1} parent=1 // loop_footer
      %s23 = sadd.s32 1, %s19
    $region7: #{tpu_custom_call.1} parent=1 // loop_footer_branch
      %18 = sbr.rel target = $region3
    $region8: #{tpu_custom_call.1} parent=1 // loop_exit
      _
    %650 = vsyncpa [#allocation3], 1
    %s651 = scalar_lea.sflag [#allocation3], 1
    %652 = vsyncpa %s651, 1
    %653 = vsyncpa [#allocation6], 1
    %654 = vsyncpa [#allocation9], 1
    %655 = vsyncpa [#allocation4], 1
    %s656 = scalar_lea.sflag [#allocation4], 1
    %657 = vsyncpa %s656, 1

</llo_original>
